<compile_context>
chip_gen: v7x
topology: tpu7x:2x2x1
jax: 0.10.0
libtpu: 0.0.40
codegen_flags: <defaults>
</compile_context>

<pallas_src>
import math
import functools

import jax
import jax.numpy as jnp
from jax.experimental import pallas as pl
from jax.experimental.pallas import tpu as pltpu


# ------------------------------- kernel ------------------------------------ #

def _fused_lstm_kernel(x_ref, h_ref, c_ref,
                       wx4_ref, wh4_ref, b4_ref,
                       wlin_ref, blin_ref,
                       logits_ref, out_ref, cnew_ref,
                       h_scratch,
                       *, hidden_size):
    """One (row tile, vocab tile) of fused LSTM gating + final Linear.

    x_ref     : (TN, E)      embedded tokens (rows in (b, t) order)
    h_ref     : (TN, H)      previous hidden state
    c_ref     : (TN, H)      previous cell state (f32)
    wx4_ref   : (E, 4H)      [Wxi|Wxf|Wxo|Wxc] pre-transposed & concatenated
    wh4_ref   : (H, 4H)      [Whi|Whf|Who|Whc] pre-transposed & concatenated
    b4_ref    : (1, 4H)      [bxi|bxf|bxo|bxc]
    wlin_ref  : (H, TV)      vocab tile of final linear weight (pre-transposed)
    blin_ref  : (1, TV)      vocab tile of final linear bias
    outputs   : logits (TN, TV), out_h (TN, H), c_new (TN, H)
    h_scratch : (TN, H)      VMEM stash of out_h for the remaining vocab tiles
    """
    H = hidden_size
    j = pl.program_id(1)

    # Gate math only once per row tile (first vocab tile).
    @pl.when(j == 0)
    def _():
        x = x_ref[...]
        h = h_ref[...]
        c_pre = c_ref[...]

        # One lane-dense (TN, 4H) gate slab from two MXU dots (f32 accumulate).
        gates = (jnp.dot(x, wx4_ref[...], preferred_element_type=jnp.float32)
                 + jnp.dot(h, wh4_ref[...], preferred_element_type=jnp.float32)
                 + b4_ref[...])

        i_g = jax.nn.sigmoid(gates[:, 0 * H:1 * H])
        f_g = jax.nn.sigmoid(gates[:, 1 * H:2 * H])
        o_g = jax.nn.sigmoid(gates[:, 2 * H:3 * H])
        c_hat = jnp.tanh(gates[:, 3 * H:4 * H])

        c_new = f_g * c_pre + i_g * c_hat
        out_h = o_g * jnp.tanh(c_new)

        cnew_ref[...] = c_new
        out_ref[...] = out_h
        h_scratch[...] = out_h.astype(h_scratch.dtype)

    # Fused final Linear on this vocab tile while the hidden tile is in VMEM.
    logits_ref[...] = (jnp.dot(h_scratch[...], wlin_ref[...],
                               preferred_element_type=jnp.float32)
                       + blin_ref[...])


# ------------------------------ wrappers ------------------------------------ #

def _pick_row_tile(n, target=512):
    """Largest multiple-of-8 divisor of n that is <= target (or n itself)."""
    if n <= target:
        return n
    best = None
    for t in range(8, target + 1, 8):
        if n % t == 0:
            best = t
    return best if best is not None else n


def _pick_col_tile(v, target=2048):
    """Largest multiple-of-128 divisor of v that is <= target (or v itself)."""
    if v <= target:
        return v
    best = None
    for t in range(128, target + 1, 128):
        if v % t == 0:
            best = t
    return best if best is not None else v


def prepare_params(raw, matmul_dtype=jnp.float32):
    """Hoist weight transposes / concats out of the per-call path.

    matmul_dtype=jnp.bfloat16 halves HBM/VMEM traffic for the MXU operands on
    v6e/v7x (elementwise math stays in f32 inside the kernel).
    """
    H = raw["W_x_i"].shape[0]
    V = raw["lin_w"].shape[0]
    wx4 = jnp.concatenate([raw["W_x_i"].T, raw["W_x_f"].T,
                           raw["W_x_o"].T, raw["W_x_c"].T],
                          axis=1).astype(matmul_dtype)            # (E, 4H)
    wh4 = jnp.concatenate([raw["W_h_i"].T, raw["W_h_f"].T,
                           raw["W_h_o"].T, raw["W_h_c"].T],
                          axis=1).astype(matmul_dtype)            # (H, 4H)
    b4 = jnp.concatenate([raw["b_x_i"], raw["b_x_f"],
                          raw["b_x_o"], raw["b_x_c"]]
                         ).reshape(1, 4 * H).astype(jnp.float32)  # (1, 4H)
    wlin = raw["lin_w"].T.astype(matmul_dtype)                    # (H, V)
    blin = raw["lin_b"].reshape(1, V).astype(jnp.float32)         # (1, V)
    return {"embed_w": raw["embed_w"], "wx4": wx4, "wh4": wh4, "b4": b4,
            "wlin": wlin, "blin": blin}


def lstm_forward(prep, x_tokens, output_pre, memory_pre,
                 *, row_tile=None, vocab_tile=None):
    """Mirrors Lstm.forward.

    x_tokens   : (T, B) int32
    output_pre : (T, B, H) float32   (h_pre)
    memory_pre : (T, B, H) float32   (c_pre)
    returns (logits:(B*T, V), (h_last:(B,H), c_last:(B,H)))
    """
    T, B = x_tokens.shape
    E, H4 = prep["wx4"].shape
    H = H4 // 4
    V = prep["wlin"].shape[1]
    N = T * B
    mm_dtype = prep["wx4"].dtype

    # Embedding lookup (glue), gathered directly in (b, t) order so the big
    # embedded tensor never needs a transpose: (B, T) -> (B, T, E).
    x_emb_bt = jnp.take(prep["embed_w"], jnp.transpose(x_tokens), axis=0)
    x_bt = x_emb_bt.reshape(N, E).astype(mm_dtype)

    # States arrive time-major; flip to (b, t) row order so the fused kernel
    # emits logits already in the (B*T, V) order the module returns.
    h_bt = jnp.transpose(output_pre, (1, 0, 2)).reshape(N, H).astype(mm_dtype)
    c_bt = jnp.transpose(memory_pre, (1, 0, 2)).reshape(N, H)

    tn = row_tile if row_tile is not None else _pick_row_tile(N)
    tv = vocab_tile if vocab_tile is not None else _pick_col_tile(V)
    assert N % tn == 0, "row tile must divide T*B"
    assert V % tv == 0, "vocab tile must divide V"
    grid = (N // tn, V // tv)

    kernel = functools.partial(_fused_lstm_kernel, hidden_size=H)

    logits, out_bt, c_new_bt = pl.pallas_call(
        kernel,
        out_shape=(jax.ShapeDtypeStruct((N, V), jnp.float32),
                   jax.ShapeDtypeStruct((N, H), jnp.float32),
                   jax.ShapeDtypeStruct((N, H), jnp.float32)),
        grid=grid,
        in_specs=[
            pl.BlockSpec((tn, E), lambda i, j: (i, 0)),          # x
            pl.BlockSpec((tn, H), lambda i, j: (i, 0)),          # h_pre
            pl.BlockSpec((tn, H), lambda i, j: (i, 0)),          # c_pre
            pl.BlockSpec((E, 4 * H), lambda i, j: (0, 0)),       # Wx4 (resident)
            pl.BlockSpec((H, 4 * H), lambda i, j: (0, 0)),       # Wh4 (resident)
            pl.BlockSpec((1, 4 * H), lambda i, j: (0, 0)),       # b4  (resident)
            pl.BlockSpec((H, tv), lambda i, j: (0, j)),          # Wlin vocab tile
            pl.BlockSpec((1, tv), lambda i, j: (0, j)),          # blin vocab tile
        ],
        out_specs=(
            pl.BlockSpec((tn, tv), lambda i, j: (i, j)),         # logits
            pl.BlockSpec((tn, H), lambda i, j: (i, 0)),          # out_h
            pl.BlockSpec((tn, H), lambda i, j: (i, 0)),          # c_new
        ),
        scratch_shapes=[pltpu.VMEM((tn, H), mm_dtype)],
        compiler_params=pltpu.CompilerParams(
            dimension_semantics=("parallel", "arbitrary"),
            vmem_limit_bytes=48 * 1024 * 1024),
    )(x_bt, h_bt, c_bt, prep["wx4"], prep["wh4"], prep["b4"],
      prep["wlin"], prep["blin"])

    out3 = out_bt.reshape(B, T, H)        # (B, T, H)
    c3 = c_new_bt.reshape(B, T, H)
    h_last = out3[:, -1, :]               # == time-major out[T-1]
    c_last = c3[:, -1, :]
    return logits, (h_last, c_last)


# ------------------------- param init / reference --------------------------- #

def init_params(key, vocab_size, embed_size, hidden_size):
    init_range = 1.0 / math.sqrt(hidden_size)

    def u(k, shape):
        return jax.random.uniform(k, shape, jnp.float32,
                                  minval=-init_range, maxval=init_range)

    names_shapes = [
        ("W_x_i", (hidden_size, embed_size)),
        ("W_x_f", (hidden_size, embed_size)),
        ("W_x_o", (hidden_size, embed_size)),
        ("W_x_c", (hidden_size, embed_size)),
        ("b_x_i", (hidden_size,)),
        ("b_x_f", (hidden_size,)),
        ("b_x_o", (hidden_size,)),
        ("b_x_c", (hidden_size,)),
        ("W_h_i", (hidden_size, hidden_size)),
        ("W_h_f", (hidden_size, hidden_size)),
        ("W_h_o", (hidden_size, hidden_size)),
        ("W_h_c", (hidden_size, hidden_size)),
        ("embed_w", (vocab_size, embed_size)),
        ("lin_w", (vocab_size, hidden_size)),
        ("lin_b", (vocab_size,)),
    ]
    keys = jax.random.split(key, len(names_shapes))
    return {name: u(k, shape) for k, (name, shape) in zip(keys, names_shapes)}


def lstm_forward_ref(params, x_tokens, output_pre, memory_pre):
    """Pure-JAX reference (no Pallas) mirroring the PyTorch math."""
    x = jnp.take(params["embed_w"], x_tokens, axis=0)
    h_pre, c_pre = output_pre, memory_pre

    def lin(a, w, b=None):
        r = a @ w.T
        return r + b if b is not None else r

    i_g = jax.nn.sigmoid(lin(x, params["W_x_i"], params["b_x_i"])
                         + lin(h_pre, params["W_h_i"]))
    f_g = jax.nn.sigmoid(lin(x, params["W_x_f"], params["b_x_f"])
                         + lin(h_pre, params["W_h_f"]))
    o_g = jax.nn.sigmoid(lin(x, params["W_x_o"], params["b_x_o"])
                         + lin(h_pre, params["W_h_o"]))
    c_hat = jnp.tanh(lin(x, params["W_x_c"], params["b_x_c"])
                     + lin(h_pre, params["W_h_c"]))
    c = f_g * c_pre + i_g * c_hat
    out = o_g * jnp.tanh(c)
    h_last, c_last = out[-1], c[-1]
    out = jnp.transpose(out, (1, 0, 2)).reshape(-1, out.shape[-1])
    logits = out @ params["lin_w"].T + params["lin_b"]
    return logits, (h_last, c_last)


# ---------------------------------- main ------------------------------------ #

if __name__ == "__main__":
    batch_size = 2
    vocab_size = 64
    embed_size = 32
    hidden_size = 32
    seq_len = 8

    key = jax.random.PRNGKey(0)
    kp, kx, kh, kc = jax.random.split(key, 4)

    raw_params = init_params(kp, vocab_size, embed_size, hidden_size)
    prep = prepare_params(raw_params)   # transposes/concats hoisted, done once

    x_tokens = jax.random.randint(kx, (seq_len, batch_size), 0, vocab_size,
                                  dtype=jnp.int32)
    output_pre = jax.random.normal(kh, (seq_len, batch_size, hidden_size),
                                   jnp.float32)
    memory_pre = jax.random.normal(kc, (seq_len, batch_size, hidden_size),
                                   jnp.float32)

    fwd = jax.jit(lstm_forward)
    logits, (h_last, c_last) = fwd(prep, x_tokens, output_pre, memory_pre)
    jax.block_until_ready((logits, h_last, c_last))

    # correctness check vs pure-JAX reference
    ref_logits, (ref_h, ref_c) = lstm_forward_ref(raw_params, x_tokens,
                                                  output_pre, memory_pre)
    assert logits.shape == (batch_size * seq_len, vocab_size)
    assert h_last.shape == (batch_size, hidden_size)
    assert c_last.shape == (batch_size, hidden_size)
    assert jnp.allclose(logits, ref_logits, atol=2e-5), \
        float(jnp.max(jnp.abs(logits - ref_logits)))
    assert jnp.allclose(h_last, ref_h, atol=2e-5)
    assert jnp.allclose(c_last, ref_c, atol=2e-5)

    print("KERNEL_OK")
</pallas_src>

<mosaic_0001>
module attributes {stable_mosaic.version = 11 : i64} {
  func.func @_fused_lstm_kernel(%arg0: i32, %arg1: i32, %arg2: memref<16x32xf32, #tpu.memory_space<vmem>>, %arg3: memref<16x32xf32, #tpu.memory_space<vmem>>, %arg4: memref<16x32xf32, #tpu.memory_space<vmem>>, %arg5: memref<32x128xf32, #tpu.memory_space<vmem>>, %arg6: memref<32x128xf32, #tpu.memory_space<vmem>>, %arg7: memref<1x128xf32, #tpu.memory_space<vmem>>, %arg8: memref<32x64xf32, #tpu.memory_space<vmem>>, %arg9: memref<1x64xf32, #tpu.memory_space<vmem>>, %arg10: memref<16x64xf32, #tpu.memory_space<vmem>>, %arg11: memref<16x32xf32, #tpu.memory_space<vmem>>, %arg12: memref<16x32xf32, #tpu.memory_space<vmem>>, %arg13: memref<16x32xf32, #tpu.memory_space<vmem>>) attributes {dimension_semantics = [#tpu.dimension_semantics<parallel>, #tpu.dimension_semantics<arbitrary>], iteration_bounds = array<i64: 1, 1>, scalar_prefetch = 0 : i64, scratch_operands = 1 : i64, tpu.core_type = #tpu.core_type<tc>, window_params = [{transform_indices = @transform_0, window_bounds = array<i64: 16, 32>}, {transform_indices = @transform_1, window_bounds = array<i64: 16, 32>}, {transform_indices = @transform_2, window_bounds = array<i64: 16, 32>}, {pipeline_mode = #tpu.pipeline_mode<synchronous>, transform_indices = @transform_3, window_bounds = array<i64: 32, 128>}, {pipeline_mode = #tpu.pipeline_mode<synchronous>, transform_indices = @transform_4, window_bounds = array<i64: 32, 128>}, {pipeline_mode = #tpu.pipeline_mode<synchronous>, transform_indices = @transform_5, window_bounds = array<i64: 1, 128>}, {transform_indices = @transform_6, window_bounds = array<i64: 32, 64>}, {transform_indices = @transform_7, window_bounds = array<i64: 1, 64>}, {transform_indices = @transform_8, window_bounds = array<i64: 16, 64>}, {transform_indices = @transform_9, window_bounds = array<i64: 16, 32>}, {transform_indices = @transform_10, window_bounds = array<i64: 16, 32>}]} {
    %c0_i32 = arith.constant 0 : i32
    %0 = arith.cmpi eq, %arg1, %c0_i32 : i32
    %1 = arith.extui %0 : i1 to i32
    %c0_i32_0 = arith.constant 0 : i32
    %2 = arith.cmpi ne, %1, %c0_i32_0 : i32
    scf.if %2 {
      %c0_8 = arith.constant 0 : index
      %c0_9 = arith.constant 0 : index
      %10 = vector.load %arg2[%c0_8, %c0_9] : memref<16x32xf32, #tpu.memory_space<vmem>>, vector<16x32xf32>
      %c0_10 = arith.constant 0 : index
      %c0_11 = arith.constant 0 : index
      %11 = vector.load %arg3[%c0_10, %c0_11] : memref<16x32xf32, #tpu.memory_space<vmem>>, vector<16x32xf32>
      %c0_12 = arith.constant 0 : index
      %c0_13 = arith.constant 0 : index
      %12 = vector.load %arg4[%c0_12, %c0_13] : memref<16x32xf32, #tpu.memory_space<vmem>>, vector<16x32xf32>
      %c0_14 = arith.constant 0 : index
      %c0_15 = arith.constant 0 : index
      %13 = vector.load %arg5[%c0_14, %c0_15] : memref<32x128xf32, #tpu.memory_space<vmem>>, vector<32x128xf32>
      %cst_16 = arith.constant dense<0.000000e+00> : vector<16x128xf32>
      %14 = tpu.matmul %10, %13, %cst_16 {dimension_numbers = #tpu.dot_dimension_numbers<[1], [0], [0], [1], [0, 0, 1, 1], [], []>} : vector<16x32xf32>, vector<32x128xf32>, vector<16x128xf32> -> vector<16x128xf32>
      %c0_17 = arith.constant 0 : index
      %c0_18 = arith.constant 0 : index
      %15 = vector.load %arg6[%c0_17, %c0_18] : memref<32x128xf32, #tpu.memory_space<vmem>>, vector<32x128xf32>
      %cst_19 = arith.constant dense<0.000000e+00> : vector<16x128xf32>
      %16 = tpu.matmul %11, %15, %cst_19 {dimension_numbers = #tpu.dot_dimension_numbers<[1], [0], [0], [1], [0, 0, 1, 1], [], []>} : vector<16x32xf32>, vector<32x128xf32>, vector<16x128xf32> -> vector<16x128xf32>
      %17 = arith.addf %14, %16 : vector<16x128xf32>
      %c0_20 = arith.constant 0 : index
      %c0_21 = arith.constant 0 : index
      %18 = vector.load %arg7[%c0_20, %c0_21] : memref<1x128xf32, #tpu.memory_space<vmem>>, vector<1x128xf32>
      %19 = vector.broadcast %18 : vector<1x128xf32> to vector<16x128xf32>
      %20 = arith.addf %17, %19 : vector<16x128xf32>
      %21 = vector.extract_strided_slice %20 {offsets = [0, 0], sizes = [16, 32], strides = [1, 1]} : vector<16x128xf32> to vector<16x32xf32>
      %22 = arith.negf %21 : vector<16x32xf32>
      %23 = math.exp %22 : vector<16x32xf32>
      %cst_22 = arith.constant 1.000000e+00 : f32
      %24 = vector.broadcast %cst_22 : f32 to vector<16x32xf32>
      %25 = arith.addf %24, %23 : vector<16x32xf32>
      %26 = arith.divf %24, %25 : vector<16x32xf32>
      %27 = vector.extract_strided_slice %20 {offsets = [0, 32], sizes = [16, 32], strides = [1, 1]} : vector<16x128xf32> to vector<16x32xf32>
      %28 = arith.negf %27 : vector<16x32xf32>
      %29 = math.exp %28 : vector<16x32xf32>
      %cst_23 = arith.constant 1.000000e+00 : f32
      %30 = vector.broadcast %cst_23 : f32 to vector<16x32xf32>
      %31 = arith.addf %30, %29 : vector<16x32xf32>
      %32 = arith.divf %30, %31 : vector<16x32xf32>
      %33 = vector.extract_strided_slice %20 {offsets = [0, 64], sizes = [16, 32], strides = [1, 1]} : vector<16x128xf32> to vector<16x32xf32>
      %34 = arith.negf %33 : vector<16x32xf32>
      %35 = math.exp %34 : vector<16x32xf32>
      %cst_24 = arith.constant 1.000000e+00 : f32
      %36 = vector.broadcast %cst_24 : f32 to vector<16x32xf32>
      %37 = arith.addf %36, %35 : vector<16x32xf32>
      %38 = arith.divf %36, %37 : vector<16x32xf32>
      %39 = vector.extract_strided_slice %20 {offsets = [0, 96], sizes = [16, 32], strides = [1, 1]} : vector<16x128xf32> to vector<16x32xf32>
      %40 = math.tanh %39 : vector<16x32xf32>
      %41 = arith.mulf %32, %12 : vector<16x32xf32>
      %42 = arith.mulf %26, %40 : vector<16x32xf32>
      %43 = arith.addf %41, %42 : vector<16x32xf32>
      %44 = math.tanh %43 : vector<16x32xf32>
      %45 = arith.mulf %38, %44 : vector<16x32xf32>
      %c0_25 = arith.constant 0 : index
      %c0_26 = arith.constant 0 : index
      %46 = vector.load %arg12[%c0_25, %c0_26] : memref<16x32xf32, #tpu.memory_space<vmem>>, vector<16x32xf32>
      tpu.vector_store %arg12[%c0_25, %c0_26], %43 {strides = array<i32>} : memref<16x32xf32, #tpu.memory_space<vmem>>, vector<16x32xf32>,
      %c0_27 = arith.constant 0 : index
      %c0_28 = arith.constant 0 : index
      %47 = vector.load %arg11[%c0_27, %c0_28] : memref<16x32xf32, #tpu.memory_space<vmem>>, vector<16x32xf32>
      tpu.vector_store %arg11[%c0_27, %c0_28], %45 {strides = array<i32>} : memref<16x32xf32, #tpu.memory_space<vmem>>, vector<16x32xf32>,
      %c0_29 = arith.constant 0 : index
      %c0_30 = arith.constant 0 : index
      %48 = vector.load %arg13[%c0_29, %c0_30] : memref<16x32xf32, #tpu.memory_space<vmem>>, vector<16x32xf32>
      tpu.vector_store %arg13[%c0_29, %c0_30], %45 {strides = array<i32>} : memref<16x32xf32, #tpu.memory_space<vmem>>, vector<16x32xf32>,
    } else {
    }
    %c0 = arith.constant 0 : index
    %c0_1 = arith.constant 0 : index
    %3 = vector.load %arg13[%c0, %c0_1] : memref<16x32xf32, #tpu.memory_space<vmem>>, vector<16x32xf32>
    %c0_2 = arith.constant 0 : index
    %c0_3 = arith.constant 0 : index
    %4 = vector.load %arg8[%c0_2, %c0_3] : memref<32x64xf32, #tpu.memory_space<vmem>>, vector<32x64xf32>
    %cst = arith.constant dense<0.000000e+00> : vector<16x64xf32>
    %5 = tpu.matmul %3, %4, %cst {dimension_numbers = #tpu.dot_dimension_numbers<[1], [0], [0], [1], [0, 0, 1, 1], [], []>} : vector<16x32xf32>, vector<32x64xf32>, vector<16x64xf32> -> vector<16x64xf32>
    %c0_4 = arith.constant 0 : index
    %c0_5 = arith.constant 0 : index
    %6 = vector.load %arg9[%c0_4, %c0_5] : memref<1x64xf32, #tpu.memory_space<vmem>>, vector<1x64xf32>
    %7 = vector.broadcast %6 : vector<1x64xf32> to vector<16x64xf32>
    %8 = arith.addf %5, %7 : vector<16x64xf32>
    %c0_6 = arith.constant 0 : index
    %c0_7 = arith.constant 0 : index
    %9 = vector.load %arg10[%c0_6, %c0_7] : memref<16x64xf32, #tpu.memory_space<vmem>>, vector<16x64xf32>
    tpu.vector_store %arg10[%c0_6, %c0_7], %8 {strides = array<i32>} : memref<16x64xf32, #tpu.memory_space<vmem>>, vector<16x64xf32>,
    return
  }
  func.func @transform_0(%arg0: i32, %arg1: i32) -> (i32, i32) {
    %c0_i32 = arith.constant 0 : i32
    %c0_i32_0 = arith.constant 0 : i32
    return %arg0, %c0_i32 : i32, i32
  }
  func.func @transform_1(%arg0: i32, %arg1: i32) -> (i32, i32) {
    %c0_i32 = arith.constant 0 : i32
    %c0_i32_0 = arith.constant 0 : i32
    return %arg0, %c0_i32 : i32, i32
  }
  func.func @transform_2(%arg0: i32, %arg1: i32) -> (i32, i32) {
    %c0_i32 = arith.constant 0 : i32
    %c0_i32_0 = arith.constant 0 : i32
    return %arg0, %c0_i32 : i32, i32
  }
  func.func @transform_3(%arg0: i32, %arg1: i32) -> (i32, i32) {
    %c0_i32 = arith.constant 0 : i32
    %c0_i32_0 = arith.constant 0 : i32
    %c0_i32_1 = arith.constant 0 : i32
    return %c0_i32, %c0_i32_0 : i32, i32
  }
  func.func @transform_4(%arg0: i32, %arg1: i32) -> (i32, i32) {
    %c0_i32 = arith.constant 0 : i32
    %c0_i32_0 = arith.constant 0 : i32
    %c0_i32_1 = arith.constant 0 : i32
    return %c0_i32, %c0_i32_0 : i32, i32
  }
  func.func @transform_5(%arg0: i32, %arg1: i32) -> (i32, i32) {
    %c0_i32 = arith.constant 0 : i32
    %c0_i32_0 = arith.constant 0 : i32
    %c0_i32_1 = arith.constant 0 : i32
    return %c0_i32, %c0_i32_0 : i32, i32
  }
  func.func @transform_6(%arg0: i32, %arg1: i32) -> (i32, i32) {
    %c0_i32 = arith.constant 0 : i32
    %c0_i32_0 = arith.constant 0 : i32
    return %c0_i32, %arg1 : i32, i32
  }
  func.func @transform_7(%arg0: i32, %arg1: i32) -> (i32, i32) {
    %c0_i32 = arith.constant 0 : i32
    %c0_i32_0 = arith.constant 0 : i32
    return %c0_i32, %arg1 : i32, i32
  }
  func.func @transform_8(%arg0: i32, %arg1: i32) -> (i32, i32) {
    %c0_i32 = arith.constant 0 : i32
    return %arg0, %arg1 : i32, i32
  }
  func.func @transform_9(%arg0: i32, %arg1: i32) -> (i32, i32) {
    %c0_i32 = arith.constant 0 : i32
    %c0_i32_0 = arith.constant 0 : i32
    return %arg0, %c0_i32 : i32, i32
  }
  func.func @transform_10(%arg0: i32, %arg1: i32) -> (i32, i32) {
    %c0_i32 = arith.constant 0 : i32
    %c0_i32_0 = arith.constant 0 : i32
    return %arg0, %c0_i32 : i32, i32
  }
}

</mosaic_0001>

<llo_original>
// kernel: lstm_forward.1
$region0: #{lstm_forward.1}
  #allocation0 [shape = 'u32[]', space=smem, size = 0x4, offset = 0x4, fixed_abs, tag = 'smem constant byte address 0x4 - core index']
  #allocation1 [shape = 'u32[144,128]{1,0:T(1,128)}', space=vmem, size = 0x12000, scoped, tag = 'internal scratch']
  #allocation2 [shape = 'f32[16,32]{1,0:T(8,128)}', space=vmem, size = 0x2000, scoped, tag = 'scratch operand']
  %s0 = inlined_call_operand.vmem [shape: f32[16,32], index: 0, kind: input, shape index: {}]
  %s1 = inlined_call_operand.vmem [shape: f32[16,32], index: 1, kind: input, shape index: {}]
  %s2 = inlined_call_operand.vmem [shape: f32[16,32], index: 2, kind: input, shape index: {}]
  %s3 = inlined_call_operand.vmem [shape: f32[32,128], index: 3, kind: input, shape index: {}]
  %s4 = inlined_call_operand.vmem [shape: f32[32,128], index: 4, kind: input, shape index: {}]
  %s5 = inlined_call_operand.vmem [shape: f32[1,128], index: 5, kind: input, shape index: {}]
  %s6 = inlined_call_operand.vmem [shape: f32[32,64], index: 6, kind: input, shape index: {}]
  %s7 = inlined_call_operand.vmem [shape: f32[1,64], index: 7, kind: input, shape index: {}]
  %s8 = inlined_call_operand.hbm [shape: f32[16,64], index: 8, kind: output, shape index: {0}]
  %s9 = inlined_call_operand.vmem [shape: f32[16,32], index: 9, kind: output, shape index: {1}]
  %s10 = inlined_call_operand.vmem [shape: f32[16,32], index: 10, kind: output, shape index: {2}]
  %11 = xla_tuple %s8, %s9, %s10
  %s12 = sld [smem:[#allocation0]]
  $region62: #{lstm_forward.1} parent=0
    _
  %s14 = ssub.s32 1, %s12
  %s15 = scalar_select 0, %s14, %s12
  $region1: #{lstm_forward.1} parent=0
    #allocation3 [shape = 'u8[8192]{0}', space=vmem, size = 0x2000, scoped, tag = 'output window, operand 0, single buffered']
    #allocation4 [shape = 's32[1]{0}', space=sflag, size = 0x4, scoped, tag = 'scoped memory for lstm_forward.1']
    %16 = vsyncpa [#allocation4], 0
    // Predicated region
    $region2: #{lstm_forward.1} parent=1 // pred_check
      _
    $region3: #{lstm_forward.1} parent=1 // pred_check_branch
      %18 = sbr.rel (0) target = $region5
    $region4: #{lstm_forward.1} parent=1 // pred_region
      _
    $region5: #{lstm_forward.1} parent=1 // pred_fallthru
      _
    // Predicated region
    $region6: #{lstm_forward.1} parent=1 // pred_check
      _
    $region7: #{lstm_forward.1} parent=1 // pred_check_branch
      %20 = sbr.rel (0) target = $region9
    $region8: #{lstm_forward.1} parent=1 // pred_region
      _
    $region9: #{lstm_forward.1} parent=1 // pred_fallthru
      _
    // Predicated region
    $region10: #{lstm_forward.1} parent=1 // pred_check
      _
    $region11: #{lstm_forward.1} parent=1 // pred_check_branch
      %22 = sbr.rel (0) target = $region13
    $region12: #{lstm_forward.1} parent=1 // pred_region
      _
    $region13: #{lstm_forward.1} parent=1 // pred_fallthru
      _
    // Predicated region
    $region14: #{lstm_forward.1} parent=1 // pred_check
      _
    $region15: #{lstm_forward.1} parent=1 // pred_check_branch
      %24 = sbr.rel (0) target = $region17
    $region16: #{lstm_forward.1} parent=1 // pred_region
      _
    $region17: #{lstm_forward.1} parent=1 // pred_fallthru
      _
    // Predicated region
    $region18: #{lstm_forward.1} parent=1 // pred_check
      _
    $region19: #{lstm_forward.1} parent=1 // pred_check_branch
      %26 = sbr.rel (0) target = $region21
    $region20: #{lstm_forward.1} parent=1 // pred_region
      _
    $region21: #{lstm_forward.1} parent=1 // pred_fallthru
      _
    // Predicated region
    $region22: #{lstm_forward.1} parent=1 // pred_check
      _
    $region23: #{lstm_forward.1} parent=1 // pred_check_branch
      %28 = sbr.rel (0) target = $region25
    $region24: #{lstm_forward.1} parent=1 // pred_region
      _
    $region25: #{lstm_forward.1} parent=1 // pred_fallthru
      _
    // Predicated region
    $region26: #{lstm_forward.1} parent=1 // pred_check
      _
    $region27: #{lstm_forward.1} parent=1 // pred_check_branch
      %30 = sbr.rel (0) target = $region29
    $region28: #{lstm_forward.1} parent=1 // pred_region
      _
    $region29: #{lstm_forward.1} parent=1 // pred_fallthru
      _
    // Predicated region
    $region30: #{lstm_forward.1} parent=1 // pred_check
      _
    $region31: #{lstm_forward.1} parent=1 // pred_check_branch
      %32 = sbr.rel (0) target = $region33
    $region32: #{lstm_forward.1} parent=1 // pred_region
      _
    $region33: #{lstm_forward.1} parent=1 // pred_fallthru
      _
    %p33 = scmp.eq.s32.totalorder 0, 0
    // Predicated region
    $region34: #{lstm_forward.1} parent=1 // pred_check
      %p34 = pneg %p33
    $region35: #{lstm_forward.1} parent=1 // pred_check_branch
      %36 = sbr.rel (%p34) target = $region37
    $region36: #{lstm_forward.1} parent=1 // pred_region
      %v37 = vld [vmem:[%s0] sm:$0xff]
      %v38 = vld [vmem:[%s0 + $0x8] sm:$0xff]
      %v39 = vld [vmem:[%s1] sm:$0xff]
      %v40 = vld [vmem:[%s1 + $0x8] sm:$0xff]
      %v41 = vld [vmem:[%s2] sm:$0xff]
      %v42 = vld [vmem:[%s2 + $0x8] sm:$0xff]
      %v43 = vld [vmem:[%s3] sm:$0xff]
      %v44 = vld [vmem:[%s3 + $0x8] sm:$0xff]
      %v45 = vld [vmem:[%s3 + $0x10] sm:$0xff]
      %v46 = vld [vmem:[%s3 + $0x18] sm:$0xff]
      %v47 = vld [vmem:[%s4] sm:$0xff]
      %v48 = vld [vmem:[%s4 + $0x8] sm:$0xff]
      %v49 = vld [vmem:[%s4 + $0x10] sm:$0xff]
      %v50 = vld [vmem:[%s4 + $0x18] sm:$0xff]
      %vm51 = vcmask 261120
      %v53 = vsel %vm51, %v39, 0
      %v56 = vsel %vm51, %v40, 0
      %58 = vmatprep.subr.mxu0 0.0
      %59 = vmatpush1.msra.mxu0 %v47
      %60 = vmatprep.subr.mxu0 0.0
      %61 = vmatpush1.msra.mxu0 %v48
      %62 = vmatprep.subr.mxu0 0.0
      %63 = vmatpush1.msra.mxu0 %v49
      %64 = vmatprep.subr.mxu0 0.0
      %65 = vmatpush1.msra.mxu0 %v50
      %66 = vmatprep.subr.mxu0 0.0
      %67 = vmatpush1.msra.mxu0 0.0
      %68 = vmatprep.subr.mxu0 0.0
      %69 = vmatpush1.msra.mxu0 0.0
      %70 = vmatprep.subr.mxu0 0.0
      %71 = vmatpush1.msra.mxu0 0.0
      %72 = vmatprep.subr.mxu0 0.0
      %73 = vmatpush1.msra.mxu0 0.0
      %74 = vmatprep.subr.mxu0 0.0
      %75 = vmatpush1.msra.mxu0 0.0
      %76 = vmatprep.subr.mxu0 0.0
      %77 = vmatpush1.msra.mxu0 0.0
      %78 = vmatprep.subr.mxu0 0.0
      %79 = vmatpush1.msra.mxu0 0.0
      %80 = vmatprep.subr.mxu0 0.0
      %81 = vmatpush1.msra.mxu0 0.0
      %82 = vmatprep.subr.mxu0 0.0
      %83 = vmatpush1.msra.mxu0 0.0
      %84 = vmatprep.subr.mxu0 0.0
      %85 = vmatpush1.msra.mxu0 0.0
      %86 = vmatprep.subr.mxu0 0.0
      %87 = vmatpush1.msra.mxu0 0.0
      %88 = vmatprep.subr.mxu0 0.0
      %89 = vmatpush1.msra.mxu0 0.0
      %90 = vmatprep.subr.mxu0 0.0
      %91 = vmatpush1.msra.mxu0 0.0
      %92 = vmatprep.subr.mxu0 0.0
      %93 = vmatpush1.msra.mxu0 0.0
      %94 = vmatprep.subr.mxu0 0.0
      %95 = vmatpush1.msra.mxu0 0.0
      %96 = vmatprep.subr.mxu0 0.0
      %97 = vmatpush1.msra.mxu0 0.0
      %98 = vmatprep.subr.mxu0 0.0
      %99 = vmatpush1.msra.mxu0 0.0
      %100 = vmatprep.subr.mxu0 0.0
      %101 = vmatpush1.msra.mxu0 0.0
      %102 = vmatprep.subr.mxu0 0.0
      %103 = vmatpush1.msra.mxu0 0.0
      %104 = vmatprep.subr.mxu0 0.0
      %105 = vmatpush1.msra.mxu0 0.0
      %106 = vmatprep.subr.mxu0 0.0
      %107 = vmatpush1.msra.mxu0 0.0
      %108 = vmatprep.subr.mxu0 0.0
      %109 = vmatpush1.msra.mxu0 0.0
      %110 = vmatprep.subr.mxu0 0.0
      %111 = vmatpush1.msra.mxu0 0.0
      %112 = vmatprep.subr.mxu0 0.0
      %113 = vmatpush1.msra.mxu0 0.0
      %114 = vmatprep.subr.mxu0 0.0
      %115 = vmatpush1.msra.mxu0 0.0
      %116 = vmatprep.subr.mxu0 0.0
      %117 = vmatpush1.msra.mxu0 0.0
      %118 = vmatprep.subr.mxu0 0.0
      %119 = vmatpush1.msra.mxu0 0.0
      %120 = vmatprep.subr.mxu0 0.0
      %121 = vmatpush1.msra.mxu0 0.0
      %122 = vmatprep.mubr.f32.mxu0 0.0
      %123 = vmatmul.mubr.f32.gmra.mrb[0].mxu0 %v53
      %v124 = vpop.f32.mrb[0].mxu0
      %v125 = vadd.f32 0.0, %v124
      %v126 = vpop.f32.mrb[0].mxu0
      %127 = vmatprep.mubr.f32.mxu0 0.0
      %128 = vmatmul.mubr.f32.gmra.mrb[0].mxu0 %v56
      %v129 = vpop.f32.mrb[0].mxu0
      %v130 = vadd.f32 0.0, %v129
      %v131 = vpop.f32.mrb[0].mxu0
      %132 = vdwg.mxu0
      %v134 = vsel %vm51, %v37, 0
      %v137 = vsel %vm51, %v38, 0
      %139 = vmatprep.subr.mxu0 0.0
      %140 = vmatpush1.msra.mxu0 %v43
      %141 = vmatprep.subr.mxu0 0.0
      %142 = vmatpush1.msra.mxu0 %v44
      %143 = vmatprep.subr.mxu0 0.0
      %144 = vmatpush1.msra.mxu0 %v45
      %145 = vmatprep.subr.mxu0 0.0
      %146 = vmatpush1.msra.mxu0 %v46
      %147 = vmatprep.subr.mxu0 0.0
      %148 = vmatpush1.msra.mxu0 0.0
      %149 = vmatprep.subr.mxu0 0.0
      %150 = vmatpush1.msra.mxu0 0.0
      %151 = vmatprep.subr.mxu0 0.0
      %152 = vmatpush1.msra.mxu0 0.0
      %153 = vmatprep.subr.mxu0 0.0
      %154 = vmatpush1.msra.mxu0 0.0
      %155 = vmatprep.subr.mxu0 0.0
      %156 = vmatpush1.msra.mxu0 0.0
      %157 = vmatprep.subr.mxu0 0.0
      %158 = vmatpush1.msra.mxu0 0.0
      %159 = vmatprep.subr.mxu0 0.0
      %160 = vmatpush1.msra.mxu0 0.0
      %161 = vmatprep.subr.mxu0 0.0
      %162 = vmatpush1.msra.mxu0 0.0
      %163 = vmatprep.subr.mxu0 0.0
      %164 = vmatpush1.msra.mxu0 0.0
      %165 = vmatprep.subr.mxu0 0.0
      %166 = vmatpush1.msra.mxu0 0.0
      %167 = vmatprep.subr.mxu0 0.0
      %168 = vmatpush1.msra.mxu0 0.0
      %169 = vmatprep.subr.mxu0 0.0
      %170 = vmatpush1.msra.mxu0 0.0
      %171 = vmatprep.subr.mxu0 0.0
      %172 = vmatpush1.msra.mxu0 0.0
      %173 = vmatprep.subr.mxu0 0.0
      %174 = vmatpush1.msra.mxu0 0.0
      %175 = vmatprep.subr.mxu0 0.0
      %176 = vmatpush1.msra.mxu0 0.0
      %177 = vmatprep.subr.mxu0 0.0
      %178 = vmatpush1.msra.mxu0 0.0
      %179 = vmatprep.subr.mxu0 0.0
      %180 = vmatpush1.msra.mxu0 0.0
      %181 = vmatprep.subr.mxu0 0.0
      %182 = vmatpush1.msra.mxu0 0.0
      %183 = vmatprep.subr.mxu0 0.0
      %184 = vmatpush1.msra.mxu0 0.0
      %185 = vmatprep.subr.mxu0 0.0
      %186 = vmatpush1.msra.mxu0 0.0
      %187 = vmatprep.subr.mxu0 0.0
      %188 = vmatpush1.msra.mxu0 0.0
      %189 = vmatprep.subr.mxu0 0.0
      %190 = vmatpush1.msra.mxu0 0.0
      %191 = vmatprep.subr.mxu0 0.0
      %192 = vmatpush1.msra.mxu0 0.0
      %193 = vmatprep.subr.mxu0 0.0
      %194 = vmatpush1.msra.mxu0 0.0
      %195 = vmatprep.subr.mxu0 0.0
      %196 = vmatpush1.msra.mxu0 0.0
      %197 = vmatprep.subr.mxu0 0.0
      %198 = vmatpush1.msra.mxu0 0.0
      %199 = vmatprep.subr.mxu0 0.0
      %200 = vmatpush1.msra.mxu0 0.0
      %201 = vmatprep.subr.mxu0 0.0
      %202 = vmatpush1.msra.mxu0 0.0
      %203 = vmatprep.mubr.f32.mxu0 0.0
      %204 = vmatmul.mubr.f32.gmra.mrb[0].mxu0 %v134
      %v205 = vpop.f32.mrb[0].mxu0
      %v206 = vadd.f32 %v125, %v205
      %v207 = vpop.f32.mrb[0].mxu0
      %208 = vmatprep.mubr.f32.mxu0 0.0
      %209 = vmatmul.mubr.f32.gmra.mrb[0].mxu0 %v137
      %v210 = vpop.f32.mrb[0].mxu0
      %v211 = vadd.f32 %v130, %v210
      %v212 = vpop.f32.mrb[0].mxu0
      %213 = vdwg.mxu0
      %v214 = vld [vmem:[%s5] sm:$0x1]
      %v216 = vlaneseq
      %v217 = vshrl.u32 %v216, 7
      %v218 = vsub.s32 0, %v217
      %v219 = vrot.slane %v214, %v218
      %v221 = vadd.f32 %v206, %v219
      %v222 = vadd.f32 %v211, %v219
      %v223 = vxor.u32 %v221, 2147483648
      %v224 = vxor.u32 %v222, 2147483648
      %v225 = vmul.f32 %v223, 1.442695
      %v226 = vpow.pop %v225
      %v227 = vmul.f32 %v224, 1.442695
      %v228 = vpow.pop %v227
      %v229 = vadd.f32 %v226, 1.0
      %v230 = vadd.f32 %v228, 1.0
      %v231 = vrcp.pop %v229
      %v232 = vmul.f32 1.0, %v231
      %v233 = vrcp.pop %v230
      %v234 = vmul.f32 1.0, %v233
      %v235 = vtanh.pop %v221
      %v236 = vtanh.pop %v222
      %239 = vrot.lane.b32.xlu0 %v41, 32
      %v240 = vpop.permute.xlu0 %239
      %241 = vrot.lane.b32.xlu0 %v42, 32
      %v242 = vpop.permute.xlu0 %241
      %v245 = vmul.f32 %v232, %v240
      %v246 = vmul.f32 %v234, %v242
      %249 = vrot.lane.b32.xlu0 %v235, 32
      %v250 = vpop.permute.xlu0 %249
      %251 = vrot.lane.b32.xlu0 %v236, 32
      %v252 = vpop.permute.xlu0 %251
      %v255 = vmul.f32 %v232, %v250
      %v256 = vmul.f32 %v234, %v252
      %259 = vrot.lane.b32.xlu0 %v255, 32
      %v260 = vpop.permute.xlu0 %259
      %261 = vrot.lane.b32.xlu0 %v256, 32
      %v262 = vpop.permute.xlu0 %261
      %v265 = vadd.f32 %v245, %v260
      %v266 = vadd.f32 %v246, %v262
      %v267 = vtanh.pop %v265
      %v268 = vtanh.pop %v266
      %271 = vrot.lane.b32.xlu0 %v267, 32
      %v272 = vpop.permute.xlu0 %271
      %273 = vrot.lane.b32.xlu0 %v268, 32
      %v274 = vpop.permute.xlu0 %273
      %v277 = vmul.f32 %v232, %v272
      %v278 = vmul.f32 %v234, %v274
      %281 = vrot.lane.b32.xlu0 %v265, 96
      %v282 = vpop.permute.xlu0 %281
      %283 = vrot.lane.b32.xlu0 %v266, 96
      %v284 = vpop.permute.xlu0 %283
      %287 = vst.msk [vmem:[%s10] sm:$0xff] %vm51, %v282
      %288 = vst.msk [vmem:[%s10 + $0x8] sm:$0xff] %vm51, %v284
      %291 = vrot.lane.b32.xlu0 %v277, 64
      %v292 = vpop.permute.xlu0 %291
      %293 = vrot.lane.b32.xlu0 %v278, 64
      %v294 = vpop.permute.xlu0 %293
      %297 = vst.msk [vmem:[%s9] sm:$0xff] %vm51, %v292
      %298 = vst.msk [vmem:[%s9 + $0x8] sm:$0xff] %vm51, %v294
      %299 = vst.msk [vmem:[#allocation2] sm:$0xff] %vm51, %v292
      %300 = vst.msk [vmem:[#allocation2 + $0x8] sm:$0xff] %vm51, %v294
    $region37: #{lstm_forward.1} parent=1 // pred_fallthru
      _
    %v301 = vld [vmem:[#allocation2] sm:$0xff]
    %v302 = vld [vmem:[#allocation2 + $0x8] sm:$0xff]
    %v303 = vld [vmem:[%s6] sm:$0xff]
    %v304 = vld [vmem:[%s6 + $0x8] sm:$0xff]
    %v305 = vld [vmem:[%s6 + $0x10] sm:$0xff]
    %v306 = vld [vmem:[%s6 + $0x18] sm:$0xff]
    %v307 = vld [vmem:[%s7] sm:$0x1]
    %v309 = vlaneseq
    %v310 = vshrl.u32 %v309, 7
    %v311 = vsub.s32 0, %v310
    %v312 = vrot.slane %v307, %v311
    %vm314 = vcmask 261120
    %v316 = vsel %vm314, %v301, 0
    %v319 = vsel %vm314, %v302, 0
    %321 = vmatprep.subr.mxu0 0.0
    %322 = vmatpush1.msra.mxu0 %v303
    %323 = vmatprep.subr.mxu0 0.0
    %324 = vmatpush1.msra.mxu0 %v304
    %325 = vmatprep.subr.mxu0 0.0
    %326 = vmatpush1.msra.mxu0 %v305
    %327 = vmatprep.subr.mxu0 0.0
    %328 = vmatpush1.msra.mxu0 %v306
    %329 = vmatprep.subr.mxu0 0.0
    %330 = vmatpush1.msra.mxu0 0.0
    %331 = vmatprep.subr.mxu0 0.0
    %332 = vmatpush1.msra.mxu0 0.0
    %333 = vmatprep.subr.mxu0 0.0
    %334 = vmatpush1.msra.mxu0 0.0
    %335 = vmatprep.subr.mxu0 0.0
    %336 = vmatpush1.msra.mxu0 0.0
    %337 = vmatprep.subr.mxu0 0.0
    %338 = vmatpush1.msra.mxu0 0.0
    %339 = vmatprep.subr.mxu0 0.0
    %340 = vmatpush1.msra.mxu0 0.0
    %341 = vmatprep.subr.mxu0 0.0
    %342 = vmatpush1.msra.mxu0 0.0
    %343 = vmatprep.subr.mxu0 0.0
    %344 = vmatpush1.msra.mxu0 0.0
    %345 = vmatprep.subr.mxu0 0.0
    %346 = vmatpush1.msra.mxu0 0.0
    %347 = vmatprep.subr.mxu0 0.0
    %348 = vmatpush1.msra.mxu0 0.0
    %349 = vmatprep.subr.mxu0 0.0
    %350 = vmatpush1.msra.mxu0 0.0
    %351 = vmatprep.subr.mxu0 0.0
    %352 = vmatpush1.msra.mxu0 0.0
    %353 = vmatprep.subr.mxu0 0.0
    %354 = vmatpush1.msra.mxu0 0.0
    %355 = vmatprep.subr.mxu0 0.0
    %356 = vmatpush1.msra.mxu0 0.0
    %357 = vmatprep.subr.mxu0 0.0
    %358 = vmatpush1.msra.mxu0 0.0
    %359 = vmatprep.subr.mxu0 0.0
    %360 = vmatpush1.msra.mxu0 0.0
    %361 = vmatprep.subr.mxu0 0.0
    %362 = vmatpush1.msra.mxu0 0.0
    %363 = vmatprep.subr.mxu0 0.0
    %364 = vmatpush1.msra.mxu0 0.0
    %365 = vmatprep.subr.mxu0 0.0
    %366 = vmatpush1.msra.mxu0 0.0
    %367 = vmatprep.subr.mxu0 0.0
    %368 = vmatpush1.msra.mxu0 0.0
    %369 = vmatprep.subr.mxu0 0.0
    %370 = vmatpush1.msra.mxu0 0.0
    %371 = vmatprep.subr.mxu0 0.0
    %372 = vmatpush1.msra.mxu0 0.0
    %373 = vmatprep.subr.mxu0 0.0
    %374 = vmatpush1.msra.mxu0 0.0
    %375 = vmatprep.subr.mxu0 0.0
    %376 = vmatpush1.msra.mxu0 0.0
    %377 = vmatprep.subr.mxu0 0.0
    %378 = vmatpush1.msra.mxu0 0.0
    %379 = vmatprep.subr.mxu0 0.0
    %380 = vmatpush1.msra.mxu0 0.0
    %381 = vmatprep.subr.mxu0 0.0
    %382 = vmatpush1.msra.mxu0 0.0
    %383 = vmatprep.subr.mxu0 0.0
    %384 = vmatpush1.msra.mxu0 0.0
    %385 = vmatprep.mubr.f32.mxu0 0.0
    %386 = vmatmul.mubr.f32.gmra.mrb[0].mxu0 %v316
    %v387 = vpop.f32.mrb[0].mxu0
    %v388 = vadd.f32 %v312, %v387
    %v389 = vpop.f32.mrb[0].mxu0
    %390 = vmatprep.mubr.f32.mxu0 0.0
    %391 = vmatmul.mubr.f32.gmra.mrb[0].mxu0 %v319
    %v392 = vpop.f32.mrb[0].mxu0
    %v393 = vadd.f32 %v312, %v392
    %v394 = vpop.f32.mrb[0].mxu0
    %395 = vdwg.mxu0
    %vm396 = vcmask 523264
    %397 = vst.msk [vmem:[#allocation3] sm:$0xff] %vm396, %v388
    %398 = vst.msk [vmem:[#allocation3 + $0x8] sm:$0xff] %vm396, %v393
    // Predicated region
    $region38: #{lstm_forward.1} parent=1 // pred_check
      _
    $region39: #{lstm_forward.1} parent=1 // pred_check_branch
      %400 = sbr.rel (0) target = $region41
    $region40: #{lstm_forward.1} parent=1 // pred_region
      %s402 = ssub.s32 256, 256
      %403 = vsyncadd [#allocation4], %s402
      %s404 = sshll.u32 [#allocation3], 4
      %s405 = int_to_ptr.vmem [resolvable:$true] %s404
      %410 = dma.vmem_to_hbm [thread:$0]  %s405, 256, %s8, [#allocation4], 128, 128, 8
    $region41: #{lstm_forward.1} parent=1 // pred_fallthru
      _
    // Predicated region
    $region42: #{lstm_forward.1} parent=1 // pred_check
      _
    $region43: #{lstm_forward.1} parent=1 // pred_check_branch
      %412 = sbr.rel (0) target = $region45
    $region44: #{lstm_forward.1} parent=1 // pred_region
      _
    $region45: #{lstm_forward.1} parent=1 // pred_fallthru
      _
    // Predicated region
    $region46: #{lstm_forward.1} parent=1 // pred_check
      _
    $region47: #{lstm_forward.1} parent=1 // pred_check_branch
      %414 = sbr.rel (0) target = $region49
    $region48: #{lstm_forward.1} parent=1 // pred_region
      _
    $region49: #{lstm_forward.1} parent=1 // pred_fallthru
      _
    // Predicated region
    $region50: #{lstm_forward.1} parent=1 // pred_check
      _
    $region51: #{lstm_forward.1} parent=1 // pred_check_branch
      %416 = sbr.rel (0) target = $region53
    $region52: #{lstm_forward.1} parent=1 // pred_region
      %417 = dma.done [#allocation4], 256
    $region53: #{lstm_forward.1} parent=1 // pred_fallthru
      _
    // Predicated region
    $region54: #{lstm_forward.1} parent=1 // pred_check
      _
    $region55: #{lstm_forward.1} parent=1 // pred_check_branch
      %419 = sbr.rel (0) target = $region57
    $region56: #{lstm_forward.1} parent=1 // pred_region
      _
    $region57: #{lstm_forward.1} parent=1 // pred_fallthru
      _
    // Predicated region
    $region58: #{lstm_forward.1} parent=1 // pred_check
      _
    $region59: #{lstm_forward.1} parent=1 // pred_check_branch
      %421 = sbr.rel (0) target = $region61
    $region60: #{lstm_forward.1} parent=1 // pred_region
      _
    $region61: #{lstm_forward.1} parent=1 // pred_fallthru
      _
    %422 = vsyncpa [#allocation4], 1

</llo_original>
